<compile_context>
chip_gen: v6e
topology: v6e:2x2x1
jax: 0.10.0
libtpu: 0.0.40
codegen_flags: <defaults>
</compile_context>

<pallas_src>
import jax
import jax.numpy as jnp
from jax.experimental import pallas as pl
from jax.experimental.pallas import tpu as pltpu

_LANE = 128
_TARGET_BLOCK_BYTES = 2 * 1024 * 1024  # ~2 MiB per block


def _identity_kernel(x_ref, o_ref):
    # Pure copy (identity) of the current tile.
    o_ref[...] = x_ref[...]


def _sublane_packing(dtype) -> int:
    # 32-bit dtypes: 8 sublanes/vreg; bf16: 16; int8/fp8: 32.
    itemsize = jnp.dtype(dtype).itemsize
    return max(8, (8 * 4) // itemsize)


def _choose_ncols(n: int, packing: int):
    widths = (4096, 2048, 1024, 512, 256, 128)
    # Prefer widths that need no padding AND keep full sublane utilization.
    for ncols in widths:
        if n % ncols == 0 and (n // ncols) % packing == 0:
            return ncols, False
    # Next best: no padding, possibly fewer rows than the packing factor
    # (legal: a block may equal the full array dims).
    for ncols in widths:
        if n % ncols == 0:
            return ncols, False
    # Rare fallback: pad (typical NCHW activation sizes never hit this).
    return 512, True


def _copy_2d(x2d):
    rows, ncols = x2d.shape
    itemsize = jnp.dtype(x2d.dtype).itemsize
    packing = _sublane_packing(x2d.dtype)

    row_bytes = ncols * itemsize
    max_rows = max(packing, (_TARGET_BLOCK_BYTES // row_bytes) // packing * packing)
    if rows <= max_rows:
        tile_rows = rows      # single block == full array (always a legal block)
    else:
        tile_rows = max_rows  # multiple of packing; last block may be partial
    grid = (pl.cdiv(rows, tile_rows),)

    return pl.pallas_call(
        _identity_kernel,
        out_shape=jax.ShapeDtypeStruct((rows, ncols), x2d.dtype),
        grid_spec=pltpu.PrefetchScalarGridSpec(
            num_scalar_prefetch=0,
            grid=grid,
            in_specs=[pl.BlockSpec((tile_rows, ncols), lambda i: (i, 0))],
            out_specs=pl.BlockSpec((tile_rows, ncols), lambda i: (i, 0)),
        ),
        input_output_aliases={0: 0},  # output reuses the input HBM buffer
        compiler_params=pltpu.CompilerParams(
            dimension_semantics=("parallel",),  # lets v7x shard across its 2 TCs
        ),
    )(x2d)


@jax.jit
def identity(x):
    """Identity forward pass: returns x unchanged (same shape, same dtype)."""
    orig_shape = x.shape
    n = int(x.size)
    packing = _sublane_packing(x.dtype)

    ncols, needs_pad = _choose_ncols(n, packing)

    if not needs_pad:
        # Fast path: reshape -> aliased copy kernel -> reshape. No extra HBM passes.
        y2d = _copy_2d(x.reshape(n // ncols, ncols))
        return y2d.reshape(orig_shape)

    # Rare fallback: pad the flat buffer up to a whole number of (packing, ncols) tiles.
    flat = x.reshape(-1)
    chunk = packing * ncols
    n_pad = pl.cdiv(n, chunk) * chunk
    padded = jnp.pad(flat, (0, n_pad - n))
    y2d = _copy_2d(padded.reshape(n_pad // ncols, ncols))
    return y2d.reshape(-1)[:n].reshape(orig_shape)


if __name__ == "__main__":
    key = jax.random.PRNGKey(0)
    x = jax.random.normal(key, (2, 4, 16, 16), dtype=jnp.float32)  # NCHW

    y = identity(x)
    y = jax.block_until_ready(y)

    assert y.shape == x.shape
    assert y.dtype == x.dtype
    assert bool(jnp.array_equal(y, x))

    print("KERNEL_OK")
</pallas_src>

<mosaic_0001>
module attributes {stable_mosaic.version = 11 : i64} {
  func.func @_identity_kernel(%arg0: i32, %arg1: memref<8x256xf32, #tpu.memory_space<vmem>>, %arg2: memref<8x256xf32, #tpu.memory_space<vmem>>) attributes {dimension_semantics = [#tpu.dimension_semantics<parallel>], iteration_bounds = array<i64: 1>, scalar_prefetch = 0 : i64, scratch_operands = 0 : i64, tpu.core_type = #tpu.core_type<tc>, window_params = [{transform_indices = @transform_0, window_bounds = array<i64: 8, 256>}, {transform_indices = @transform_1, window_bounds = array<i64: 8, 256>}]} {
    %c0 = arith.constant 0 : index
    %c0_0 = arith.constant 0 : index
    %0 = vector.load %arg1[%c0, %c0_0] : memref<8x256xf32, #tpu.memory_space<vmem>>, vector<8x256xf32>
    %c0_1 = arith.constant 0 : index
    %c0_2 = arith.constant 0 : index
    %1 = vector.load %arg2[%c0_1, %c0_2] : memref<8x256xf32, #tpu.memory_space<vmem>>, vector<8x256xf32>
    tpu.vector_store %arg2[%c0_1, %c0_2], %0 {strides = array<i32>} : memref<8x256xf32, #tpu.memory_space<vmem>>, vector<8x256xf32>,
    return
  }
  func.func @transform_0(%arg0: i32) -> (i32, i32) {
    %c0_i32 = arith.constant 0 : i32
    %c0_i32_0 = arith.constant 0 : i32
    return %arg0, %c0_i32 : i32, i32
  }
  func.func @transform_1(%arg0: i32) -> (i32, i32) {
    %c0_i32 = arith.constant 0 : i32
    %c0_i32_0 = arith.constant 0 : i32
    return %arg0, %c0_i32 : i32, i32
  }
}

</mosaic_0001>

<llo_original>
// kernel: identity.1
$region0: #{identity.1}
  #allocation0 [shape = 'u32[]', space=smem, size = 0x4, offset = 0x4, fixed_abs, tag = 'smem constant byte address 0x4 - core index']
  #allocation1 [shape = 'u32[144,128]{1,0:T(1,128)}', space=vmem, size = 0x12000, scoped, tag = 'internal scratch']
  %s0 = inlined_call_operand.vmem [shape: f32[8,256], index: 0, kind: input, shape index: {}, may-alias: {0,1}]
  %s1 = inlined_call_operand.vmem [shape: f32[8,256], index: 1, kind: output, shape index: {}, may-alias: {0,1}]
  %s2 = sld [smem:[#allocation0]]
  $region14: #{identity.1} parent=0
    _
  %s4 = ssub.s32 1, %s2
  %s5 = scalar_select 0, %s4, %s2
  // Predicated region
  $region2: #{identity.1} parent=0 // pred_check
    _
  $region3: #{identity.1} parent=0 // pred_check_branch
    %7 = sbr.rel (0) target = $region5
  $region4: #{identity.1} parent=0 // pred_region
    _
  $region5: #{identity.1} parent=0 // pred_fallthru
    _
  %v8 = vld [vmem:[%s0] sm:$0xff]
  %v9 = vld [vmem:[%s0 + $0x8] sm:$0xff]
  %10 = vst [vmem:[%s1] sm:$0xff] %v8
  %11 = vst [vmem:[%s1 + $0x8] sm:$0xff] %v9
  // Predicated region
  $region6: #{identity.1} parent=0 // pred_check
    _
  $region7: #{identity.1} parent=0 // pred_check_branch
    %13 = sbr.rel (0) target = $region9
  $region8: #{identity.1} parent=0 // pred_region
    _
  $region9: #{identity.1} parent=0 // pred_fallthru
    _
  // Predicated region
  $region10: #{identity.1} parent=0 // pred_check
    _
  $region11: #{identity.1} parent=0 // pred_check_branch
    %15 = sbr.rel (0) target = $region13
  $region12: #{identity.1} parent=0 // pred_region
    _
  $region13: #{identity.1} parent=0 // pred_fallthru
    _

</llo_original>
